<compile_context>
chip_gen: v5e
topology: v5e:2x2
jax: 0.10.0
libtpu: 0.0.40
codegen_flags: <defaults>
</compile_context>

<pallas_src>
import functools

import jax
import jax.numpy as jnp
from jax.experimental import pallas as pl
from jax.experimental.pallas import tpu as pltpu


def _round_up(v, m):
    return (v + m - 1) // m * m


def _cdiv(a, b):
    return (a + b - 1) // b


def _vmem_budgets():
    """(tile-sizing budget, scoped vmem limit) in bytes, per TPU generation."""
    kind = ""
    try:
        kind = jax.devices()[0].device_kind.lower()
    except Exception:
        pass
    if "v5" in kind or "v6" in kind:
        # 128 MiB physical VMEM: large tiles, raised scoped limit.
        return 56 * 1024 * 1024, 100 * 1024 * 1024
    # v7x (64 MiB per TensorCore) or unknown backend: stay conservative.
    return 24 * 1024 * 1024, 56 * 1024 * 1024


# ----------------------- fused single-pass kernel ------------------------------


def _fused_kernel(x_ref, w1_ref, b1_ref, w2_ref, b2_ref, o_ref, *,
                  inv_hw, hw, hw_block):
    x = x_ref[...]                                             # (b_t, C, hw_block)
    if hw != hw_block:
        # Boundary lanes beyond hw are NOT guaranteed zero: mask them out of
        # the pooled sum. (Boundary output stores are masked by the pipeline.)
        lane = jax.lax.broadcasted_iota(jnp.int32, x.shape, 2)
        x = jnp.where(lane < hw, x, jnp.zeros_like(x))
    pooled = jnp.sum(x, axis=2, dtype=jnp.float32) * inv_hw    # (b_t, C)
    h = jnp.dot(pooled, w1_ref[...], preferred_element_type=jnp.float32)
    h = jnp.maximum(h + b1_ref[...], 0.0)                      # (b_t, C_red)
    s = jnp.dot(h, w2_ref[...], preferred_element_type=jnp.float32)
    s = jax.nn.sigmoid(s + b2_ref[...])                        # (b_t, C) f32
    # One lane->sublane relayout per batch tile; multiply stays in x's dtype.
    scale = s.astype(o_ref.dtype)[:, :, None]                  # (b_t, C, 1)
    o_ref[...] = x_ref[...] * scale


# ----------------- two-pass fallback: pool+FC, then scale ----------------------


def _pool_fc_kernel(x_ref, w1_ref, b1_ref, w2_ref, b2_ref, s_ref, acc_ref, *,
                    inv_hw, hw, hw_tile):
    hi = pl.program_id(1)

    @pl.when(hi == 0)
    def _():
        acc_ref[...] = jnp.zeros_like(acc_ref)

    x = x_ref[...]                                             # (b_t, C, hw_tile)
    if hw % hw_tile != 0:
        # Ragged last spatial tile: mask out-of-range lanes before summing.
        lane = jax.lax.broadcasted_iota(jnp.int32, x.shape, 2)
        x = jnp.where(hi * hw_tile + lane < hw, x, jnp.zeros_like(x))
    acc_ref[...] += jnp.sum(x, axis=2, dtype=jnp.float32)      # (b_t, C)

    @pl.when(hi == pl.num_programs(1) - 1)
    def _():
        pooled = acc_ref[...] * inv_hw
        h = jnp.dot(pooled, w1_ref[...], preferred_element_type=jnp.float32)
        h = jnp.maximum(h + b1_ref[...], 0.0)
        s = jnp.dot(h, w2_ref[...], preferred_element_type=jnp.float32)
        s = jax.nn.sigmoid(s + b2_ref[...])
        s_ref[...] = s[:, :, None]                             # (b_t, C, 1) f32


def _scale_kernel(x_ref, s_ref, o_ref):
    # (b_t, C, hw_t) * (b_t, C, 1); scale already has C on sublanes, so there
    # is no per-tile relayout, and the multiply stays in the input dtype.
    o_ref[...] = x_ref[...] * s_ref[...].astype(o_ref.dtype)


# ---------------------------------- wrapper ------------------------------------


def channel_attention(x_nchw, w1, b1, w2, b2, *,
                      tile_budget_bytes=None, vmem_limit_bytes=None):
    """x_nchw: (B, C, H, W); w1: (C, C_red); w2: (C_red, C). Returns (B, C, H, W)."""
    b, c, h, w = x_nchw.shape
    hw = h * w
    c_red = w1.shape[1]
    dsize = jnp.dtype(x_nchw.dtype).itemsize

    default_budget, default_limit = _vmem_budgets()
    tile_budget = default_budget if tile_budget_bytes is None else tile_budget_bytes
    vmem_limit = default_limit if vmem_limit_bytes is None else vmem_limit_bytes

    x_flat = x_nchw.reshape(b, c, hw)            # contiguous reshape: free
    b1_2d = b1.reshape(1, c_red)
    b2_2d = b2.reshape(1, c)
    inv_hw = 1.0 / float(hw)
    hw_block = _round_up(hw, 128)                # lane-dense full-HW block

    # Batch tiling: <= 8 sublane rows for the FC matmuls; guarantee >= 2 batch
    # tiles when B >= 2 so the batch-parallel work spans both v7x TensorCores.
    b_tile = min(b, 8)
    if b >= 2 and _cdiv(b, b_tile) < 2:
        b_tile = _cdiv(b, 2)

    # ---------------- fused single-pass path (2x HBM traffic) ------------------
    bt = b_tile
    # 6x slab: double-buffered input + output tiles plus in-kernel headroom.
    while bt > 1 and 6 * bt * c * hw_block * dsize > tile_budget:
        bt = _cdiv(bt, 2)
    if 6 * bt * c * hw_block * dsize <= tile_budget:
        n_b = _cdiv(b, bt)
        cost = pl.CostEstimate(
            flops=2 * b * c * hw + 4 * b * c * c_red,
            transcendentals=b * c,
            bytes_accessed=2 * b * c * hw * dsize,
        )
        out_flat = pl.pallas_call(
            functools.partial(_fused_kernel, inv_hw=inv_hw, hw=hw,
                              hw_block=hw_block),
            out_shape=jax.ShapeDtypeStruct((b, c, hw), x_flat.dtype),
            grid_spec=pltpu.PrefetchScalarGridSpec(
                num_scalar_prefetch=0,
                grid=(n_b,),
                in_specs=[
                    pl.BlockSpec((bt, c, hw_block), lambda bi: (bi, 0, 0)),
                    pl.BlockSpec((c, c_red), lambda bi: (0, 0)),
                    pl.BlockSpec((1, c_red), lambda bi: (0, 0)),
                    pl.BlockSpec((c_red, c), lambda bi: (0, 0)),
                    pl.BlockSpec((1, c), lambda bi: (0, 0)),
                ],
                out_specs=pl.BlockSpec((bt, c, hw_block), lambda bi: (bi, 0, 0)),
            ),
            compiler_params=pltpu.CompilerParams(
                dimension_semantics=("parallel",),
                vmem_limit_bytes=vmem_limit),
            cost_estimate=cost,
        )(x_flat, w1, b1_2d, w2, b2_2d)
        return out_flat.reshape(b, c, h, w)

    # -------------- two-pass streamed fallback (very large C * HW) -------------
    per_lane = b_tile * c * dsize

    def pick_hw_tile(buffers):
        t = min(hw_block, 4096)
        while t > 128 and buffers * t * per_lane > tile_budget:
            t -= 128
        return t

    hw_tile1 = pick_hw_tile(3)   # pass 1: only the input is double-buffered
    hw_tile2 = pick_hw_tile(5)   # pass 2: input + output double-buffered
    n_b = _cdiv(b, b_tile)
    n_hw1 = _cdiv(hw, hw_tile1)
    n_hw2 = _cdiv(hw, hw_tile2)

    # pass 1: scale = sigmoid(fc2(relu(fc1(mean(x))))), emitted as (B, C, 1).
    pool_cost = pl.CostEstimate(
        flops=b * c * hw + 4 * b * c * c_red,
        transcendentals=b * c,
        bytes_accessed=b * c * hw * dsize + b * c * 4,
    )
    scale = pl.pallas_call(
        functools.partial(_pool_fc_kernel, inv_hw=inv_hw, hw=hw,
                          hw_tile=hw_tile1),
        out_shape=jax.ShapeDtypeStruct((b, c, 1), jnp.float32),
        grid_spec=pltpu.PrefetchScalarGridSpec(
            num_scalar_prefetch=0,
            grid=(n_b, n_hw1),                    # reduction (HW) axis last
            in_specs=[
                pl.BlockSpec((b_tile, c, hw_tile1), lambda bi, hi: (bi, 0, hi)),
                pl.BlockSpec((c, c_red), lambda bi, hi: (0, 0)),
                pl.BlockSpec((1, c_red), lambda bi, hi: (0, 0)),
                pl.BlockSpec((c_red, c), lambda bi, hi: (0, 0)),
                pl.BlockSpec((1, c), lambda bi, hi: (0, 0)),
            ],
            out_specs=pl.BlockSpec((b_tile, c, 1), lambda bi, hi: (bi, 0, 0)),
            scratch_shapes=[pltpu.VMEM((b_tile, c), jnp.float32)],
        ),
        compiler_params=pltpu.CompilerParams(
            dimension_semantics=("parallel", "arbitrary"),
            vmem_limit_bytes=vmem_limit),
        cost_estimate=pool_cost,
    )(x_flat, w1, b1_2d, w2, b2_2d)

    # pass 2: out = x * scale (streamed, lane-dense stores).
    scale_cost = pl.CostEstimate(
        flops=b * c * hw,
        transcendentals=0,
        bytes_accessed=2 * b * c * hw * dsize + b * c * 4,
    )
    out_flat = pl.pallas_call(
        _scale_kernel,
        out_shape=jax.ShapeDtypeStruct((b, c, hw), x_flat.dtype),
        grid_spec=pltpu.PrefetchScalarGridSpec(
            num_scalar_prefetch=0,
            grid=(n_b, n_hw2),
            in_specs=[
                pl.BlockSpec((b_tile, c, hw_tile2), lambda bi, hi: (bi, 0, hi)),
                pl.BlockSpec((b_tile, c, 1), lambda bi, hi: (bi, 0, 0)),
            ],
            out_specs=pl.BlockSpec((b_tile, c, hw_tile2), lambda bi, hi: (bi, 0, hi)),
        ),
        compiler_params=pltpu.CompilerParams(
            dimension_semantics=("parallel", "parallel"),
            vmem_limit_bytes=vmem_limit),
        cost_estimate=scale_cost,
    )(x_flat, scale)

    return out_flat.reshape(b, c, h, w)


def _reference(x, w1, b1, w2, b2):
    y = jnp.mean(x, axis=(2, 3))                  # (B, C)
    y = jnp.maximum(y @ w1 + b1, 0.0)
    y = jax.nn.sigmoid(y @ w2 + b2)               # (B, C)
    return x * y[:, :, None, None]


if __name__ == "__main__":
    # Small deterministic example: B=2, C=16, H=W=16, reduction_ratio=8 -> hidden=2
    B, C, H, W = 2, 16, 16, 16
    reduction_ratio = 8
    C_red = C // reduction_ratio

    key = jax.random.PRNGKey(0)
    kx, k1, k2, k3, k4 = jax.random.split(key, 5)

    x = jax.random.normal(kx, (B, C, H, W), dtype=jnp.float32)
    # Linear weights stored as (in, out) so forward is y @ W + b
    w1 = jax.random.normal(k1, (C, C_red), dtype=jnp.float32) * 0.1
    b1 = jax.random.normal(k2, (C_red,), dtype=jnp.float32) * 0.1
    w2 = jax.random.normal(k3, (C_red, C), dtype=jnp.float32) * 0.1
    b2 = jax.random.normal(k4, (C,), dtype=jnp.float32) * 0.1

    ref = _reference(x, w1, b1, w2, b2)

    # Fused single-pass path (default per-generation budgets).
    out = jax.block_until_ready(channel_attention(x, w1, b1, w2, b2))
    assert out.shape == (B, C, H, W)
    assert jnp.allclose(out, ref, atol=1e-5, rtol=1e-5), "fused path mismatch"

    # Two-pass streamed fallback (forced by a tiny tile budget) also verified.
    out2 = jax.block_until_ready(
        channel_attention(x, w1, b1, w2, b2, tile_budget_bytes=32 * 1024))
    assert jnp.allclose(out2, ref, atol=1e-5, rtol=1e-5), "two-pass path mismatch"

    print("KERNEL_OK")
</pallas_src>

<mosaic_0001>
module attributes {stable_mosaic.version = 11 : i64} {
  func.func @_fused_kernel(%arg0: i32, %arg1: memref<1x16x256xf32, #tpu.memory_space<vmem>>, %arg2: memref<16x2xf32, #tpu.memory_space<vmem>>, %arg3: memref<1x2xf32, #tpu.memory_space<vmem>>, %arg4: memref<2x16xf32, #tpu.memory_space<vmem>>, %arg5: memref<1x16xf32, #tpu.memory_space<vmem>>, %arg6: memref<1x16x256xf32, #tpu.memory_space<vmem>>) attributes {dimension_semantics = [#tpu.dimension_semantics<parallel>], iteration_bounds = array<i64: 2>, scalar_prefetch = 0 : i64, scratch_operands = 0 : i64, tpu.core_type = #tpu.core_type<tc>, window_params = [{transform_indices = @transform_0, window_bounds = array<i64: 1, 16, 256>}, {pipeline_mode = #tpu.pipeline_mode<synchronous>, transform_indices = @transform_1, window_bounds = array<i64: 16, 2>}, {pipeline_mode = #tpu.pipeline_mode<synchronous>, transform_indices = @transform_2, window_bounds = array<i64: 1, 2>}, {pipeline_mode = #tpu.pipeline_mode<synchronous>, transform_indices = @transform_3, window_bounds = array<i64: 2, 16>}, {pipeline_mode = #tpu.pipeline_mode<synchronous>, transform_indices = @transform_4, window_bounds = array<i64: 1, 16>}, {transform_indices = @transform_5, window_bounds = array<i64: 1, 16, 256>}]} {
    %c0 = arith.constant 0 : index
    %c0_0 = arith.constant 0 : index
    %c0_1 = arith.constant 0 : index
    %0 = vector.load %arg1[%c0, %c0_0, %c0_1] : memref<1x16x256xf32, #tpu.memory_space<vmem>>, vector<1x16x256xf32>
    %cst = arith.constant dense<0.000000e+00> : vector<1x16xf32>
    %1 = vector.multi_reduction <add>, %0, %cst [2] : vector<1x16x256xf32> to vector<1x16xf32>
    %cst_2 = arith.constant 3.906250e-03 : f32
    %2 = vector.broadcast %cst_2 : f32 to vector<1x16xf32>
    %3 = arith.mulf %1, %2 : vector<1x16xf32>
    %c0_3 = arith.constant 0 : index
    %c0_4 = arith.constant 0 : index
    %4 = vector.load %arg2[%c0_3, %c0_4] : memref<16x2xf32, #tpu.memory_space<vmem>>, vector<16x2xf32>
    %cst_5 = arith.constant dense<0.000000e+00> : vector<1x2xf32>
    %5 = tpu.matmul %3, %4, %cst_5 {dimension_numbers = #tpu.dot_dimension_numbers<[1], [0], [0], [1], [0, 0, 1, 1], [], []>} : vector<1x16xf32>, vector<16x2xf32>, vector<1x2xf32> -> vector<1x2xf32>
    %c0_6 = arith.constant 0 : index
    %c0_7 = arith.constant 0 : index
    %6 = vector.load %arg3[%c0_6, %c0_7] : memref<1x2xf32, #tpu.memory_space<vmem>>, vector<1x2xf32>
    %7 = arith.addf %5, %6 : vector<1x2xf32>
    %cst_8 = arith.constant 0.000000e+00 : f32
    %8 = vector.broadcast %cst_8 : f32 to vector<1x2xf32>
    %9 = arith.maximumf %7, %8 : vector<1x2xf32>
    %c0_9 = arith.constant 0 : index
    %c0_10 = arith.constant 0 : index
    %10 = vector.load %arg4[%c0_9, %c0_10] : memref<2x16xf32, #tpu.memory_space<vmem>>, vector<2x16xf32>
    %cst_11 = arith.constant dense<0.000000e+00> : vector<1x16xf32>
    %11 = tpu.matmul %9, %10, %cst_11 {dimension_numbers = #tpu.dot_dimension_numbers<[1], [0], [0], [1], [0, 0, 1, 1], [], []>} : vector<1x2xf32>, vector<2x16xf32>, vector<1x16xf32> -> vector<1x16xf32>
    %c0_12 = arith.constant 0 : index
    %c0_13 = arith.constant 0 : index
    %12 = vector.load %arg5[%c0_12, %c0_13] : memref<1x16xf32, #tpu.memory_space<vmem>>, vector<1x16xf32>
    %13 = arith.addf %11, %12 : vector<1x16xf32>
    %14 = arith.negf %13 : vector<1x16xf32>
    %15 = math.exp %14 : vector<1x16xf32>
    %cst_14 = arith.constant 1.000000e+00 : f32
    %16 = vector.broadcast %cst_14 : f32 to vector<1x16xf32>
    %17 = arith.addf %16, %15 : vector<1x16xf32>
    %18 = arith.divf %16, %17 : vector<1x16xf32>
    %19 = vector.shape_cast %18 : vector<1x16xf32> to vector<1x16x1xf32>
    %c0_15 = arith.constant 0 : index
    %c0_16 = arith.constant 0 : index
    %c0_17 = arith.constant 0 : index
    %20 = vector.load %arg1[%c0_15, %c0_16, %c0_17] : memref<1x16x256xf32, #tpu.memory_space<vmem>>, vector<1x16x256xf32>
    %21 = vector.broadcast %19 : vector<1x16x1xf32> to vector<1x16x256xf32>
    %22 = arith.mulf %20, %21 : vector<1x16x256xf32>
    %c0_18 = arith.constant 0 : index
    %c0_19 = arith.constant 0 : index
    %c0_20 = arith.constant 0 : index
    %23 = vector.load %arg6[%c0_18, %c0_19, %c0_20] : memref<1x16x256xf32, #tpu.memory_space<vmem>>, vector<1x16x256xf32>
    tpu.vector_store %arg6[%c0_18, %c0_19, %c0_20], %22 {strides = array<i32>} : memref<1x16x256xf32, #tpu.memory_space<vmem>>, vector<1x16x256xf32>,
    return
  }
  func.func @transform_0(%arg0: i32) -> (i32, i32, i32) {
    %c0_i32 = arith.constant 0 : i32
    %c0_i32_0 = arith.constant 0 : i32
    %c0_i32_1 = arith.constant 0 : i32
    return %arg0, %c0_i32, %c0_i32_0 : i32, i32, i32
  }
  func.func @transform_1(%arg0: i32) -> (i32, i32) {
    %c0_i32 = arith.constant 0 : i32
    %c0_i32_0 = arith.constant 0 : i32
    %c0_i32_1 = arith.constant 0 : i32
    return %c0_i32, %c0_i32_0 : i32, i32
  }
  func.func @transform_2(%arg0: i32) -> (i32, i32) {
    %c0_i32 = arith.constant 0 : i32
    %c0_i32_0 = arith.constant 0 : i32
    %c0_i32_1 = arith.constant 0 : i32
    return %c0_i32, %c0_i32_0 : i32, i32
  }
  func.func @transform_3(%arg0: i32) -> (i32, i32) {
    %c0_i32 = arith.constant 0 : i32
    %c0_i32_0 = arith.constant 0 : i32
    %c0_i32_1 = arith.constant 0 : i32
    return %c0_i32, %c0_i32_0 : i32, i32
  }
  func.func @transform_4(%arg0: i32) -> (i32, i32) {
    %c0_i32 = arith.constant 0 : i32
    %c0_i32_0 = arith.constant 0 : i32
    %c0_i32_1 = arith.constant 0 : i32
    return %c0_i32, %c0_i32_0 : i32, i32
  }
  func.func @transform_5(%arg0: i32) -> (i32, i32, i32) {
    %c0_i32 = arith.constant 0 : i32
    %c0_i32_0 = arith.constant 0 : i32
    %c0_i32_1 = arith.constant 0 : i32
    return %arg0, %c0_i32, %c0_i32_0 : i32, i32, i32
  }
}

</mosaic_0001>

<llo_original>
// kernel: tpu_custom_call.1
$region0: #{tpu_custom_call.1}
  #allocation0 [shape = 'u32[]', space=smem, size = 0x4, offset = 0x4, fixed_abs, tag = 'smem constant byte address 0x4 - core index']
  #allocation1 [shape = 'u32[72,128]{1,0:T(1,128)}', space=vmem, size = 0x9000, scoped, tag = 'internal scratch']
  %s0 = inlined_call_operand.hbm [shape: f32[2,16,256], index: 0, kind: input, shape index: {}]
  %s1 = inlined_call_operand.vmem [shape: f32[16,2], index: 1, kind: input, shape index: {}]
  %s2 = inlined_call_operand.vmem [shape: f32[1,2], index: 2, kind: input, shape index: {}]
  %s3 = inlined_call_operand.vmem [shape: f32[2,16], index: 3, kind: input, shape index: {}]
  %s4 = inlined_call_operand.vmem [shape: f32[1,16], index: 4, kind: input, shape index: {}]
  %s5 = inlined_call_operand.hbm [shape: f32[2,16,256], index: 5, kind: output, shape index: {}]
  %s6 = sld [smem:[#allocation0]]
  $region57: #{tpu_custom_call.1} parent=0
    _
  %s8 = ssub.s32 1, %s6
  %s9 = scalar_select 0, %s8, %s6
  $region1: #{tpu_custom_call.1} parent=0
    #allocation2 [shape = 'u8[32768]{0}', space=vmem, size = 0x8000, scoped, tag = 'input window, operand 0']
    #allocation3 [shape = 's32[2]{0}', space=sflag, size = 0x8, scoped, tag = 'scoped memory for tpu_custom_call.1']
    #allocation4 [shape = 's32[2]{0}', space=sflag, size = 0x8, scoped, tag = 'scoped memory for tpu_custom_call.1']
    #allocation5 [shape = 'u8[32768]{0}', space=vmem, size = 0x8000, scoped, tag = 'output window, operand 0']
    %10 = vsyncpa [#allocation3], 0
    %s11 = scalar_lea.sflag [#allocation3], 1
    %12 = vsyncpa %s11, 0
    %13 = vsyncpa [#allocation4], 0
    %s14 = scalar_lea.sflag [#allocation4], 1
    %15 = vsyncpa %s14, 0
    loop: start=0, step=1, limit=4
    $region2: #{tpu_custom_call.1} parent=1 // loop_pre_header
      _
    $region3: #{tpu_custom_call.1} parent=1 // loop_header
      %s17 = sphi 0, %s21
      %p18 = scmp.ge.s32.totalorder %s17, 4
      %s27 = sphi 0, %s29
      %s30 = sphi 0, %s27
      %s31 = sphi 0, %s30
      %s47 = sphi 0, %s31
      %s51 = sphi 0, %s51
      %s53 = sphi 0, %s51
      %s54 = sphi 0, %s53
      %s68 = sphi 0, %s54
      %s72 = sphi 0, %s72
      %s74 = sphi 0, %s72
      %s75 = sphi 0, %s74
      %s89 = sphi 0, %s75
      %s93 = sphi 0, %s93
      %s95 = sphi 0, %s93
      %s96 = sphi 0, %s95
      %s110 = sphi 0, %s96
      %s114 = sphi 0, %s114
      %s116 = sphi 0, %s114
      %s117 = sphi 0, %s116
      %s131 = sphi 0, %s117
      %s137 = sphi 0, %s139
      %s140 = sphi 0, %s137
      %s141 = sphi 0, %s140
      %s157 = sphi 0, %s141
    $region4: #{tpu_custom_call.1} parent=1 // loop_header_branch
      %20 = sbr.rel (%p18) target = $region8
    $region5: #{tpu_custom_call.1} parent=1 // loop_body
      %s22 = ssub.s32 %s17, 1
      %s23 = ssub.s32 %s17, 2
      %s24 = sadd.s32 %s17, 1
      %s25 = ssub.s32 %s17, %s24
      %p26 = scmp.eq.s32.totalorder %s25, 0
      %s28 = sadd.s32 %s27, 1
      %s29 = scalar_select %p26, %s27, %s28
      %p32 = pneg %p26
      %p33 = scmp.eq.s32.totalorder %s17, 1
      %p34 = por %p32, %p33
      %p35 = scmp.ne.s32.totalorder %s27, %s30
      %p36 = scmp.eq.s32.totalorder %s17, 0
      %p37 = por %p35, %p36
      %p38 = scmp.ne.s32.totalorder %s27, %s30
      %p39 = scmp.eq.s32.totalorder %s22, 1
      %p40 = por %p38, %p39
      %p41 = scmp.ne.s32.totalorder %s30, %s31
      %p42 = scmp.eq.s32.totalorder %s22, 0
      %p43 = por %p41, %p42
      %p44 = scmp.ne.s32.totalorder %s30, %s31
      %p45 = scmp.eq.s32.totalorder %s23, 1
      %p46 = por %p44, %p45
      %p48 = scmp.ne.s32.totalorder %s31, %s47
      %p49 = scmp.eq.s32.totalorder %s23, 0
      %p50 = por %p48, %p49
      %s52 = sadd.s32 %s51, 1
      %p55 = scmp.eq.s32.totalorder %s17, 1
      %p56 = scmp.ne.s32.totalorder %s51, %s53
      %p57 = scmp.eq.s32.totalorder %s17, 0
      %p58 = por %p56, %p57
      %p59 = scmp.ne.s32.totalorder %s51, %s53
      %p60 = scmp.eq.s32.totalorder %s22, 1
      %p61 = por %p59, %p60
      %p62 = scmp.ne.s32.totalorder %s53, %s54
      %p63 = scmp.eq.s32.totalorder %s22, 0
      %p64 = por %p62, %p63
      %p65 = scmp.ne.s32.totalorder %s53, %s54
      %p66 = scmp.eq.s32.totalorder %s23, 1
      %p67 = por %p65, %p66
      %p69 = scmp.ne.s32.totalorder %s54, %s68
      %p70 = scmp.eq.s32.totalorder %s23, 0
      %p71 = por %p69, %p70
      %s73 = sadd.s32 %s72, 1
      %p76 = scmp.eq.s32.totalorder %s17, 1
      %p77 = scmp.ne.s32.totalorder %s72, %s74
      %p78 = scmp.eq.s32.totalorder %s17, 0
      %p79 = por %p77, %p78
      %p80 = scmp.ne.s32.totalorder %s72, %s74
      %p81 = scmp.eq.s32.totalorder %s22, 1
      %p82 = por %p80, %p81
      %p83 = scmp.ne.s32.totalorder %s74, %s75
      %p84 = scmp.eq.s32.totalorder %s22, 0
      %p85 = por %p83, %p84
      %p86 = scmp.ne.s32.totalorder %s74, %s75
      %p87 = scmp.eq.s32.totalorder %s23, 1
      %p88 = por %p86, %p87
      %p90 = scmp.ne.s32.totalorder %s75, %s89
      %p91 = scmp.eq.s32.totalorder %s23, 0
      %p92 = por %p90, %p91
      %s94 = sadd.s32 %s93, 1
      %p97 = scmp.eq.s32.totalorder %s17, 1
      %p98 = scmp.ne.s32.totalorder %s93, %s95
      %p99 = scmp.eq.s32.totalorder %s17, 0
      %p100 = por %p98, %p99
      %p101 = scmp.ne.s32.totalorder %s93, %s95
      %p102 = scmp.eq.s32.totalorder %s22, 1
      %p103 = por %p101, %p102
      %p104 = scmp.ne.s32.totalorder %s95, %s96
      %p105 = scmp.eq.s32.totalorder %s22, 0
      %p106 = por %p104, %p105
      %p107 = scmp.ne.s32.totalorder %s95, %s96
      %p108 = scmp.eq.s32.totalorder %s23, 1
      %p109 = por %p107, %p108
      %p111 = scmp.ne.s32.totalorder %s96, %s110
      %p112 = scmp.eq.s32.totalorder %s23, 0
      %p113 = por %p111, %p112
      %s115 = sadd.s32 %s114, 1
      %p118 = scmp.eq.s32.totalorder %s17, 1
      %p119 = scmp.ne.s32.totalorder %s114, %s116
      %p120 = scmp.eq.s32.totalorder %s17, 0
      %p121 = por %p119, %p120
      %p122 = scmp.ne.s32.totalorder %s114, %s116
      %p123 = scmp.eq.s32.totalorder %s22, 1
      %p124 = por %p122, %p123
      %p125 = scmp.ne.s32.totalorder %s116, %s117
      %p126 = scmp.eq.s32.totalorder %s22, 0
      %p127 = por %p125, %p126
      %p128 = scmp.ne.s32.totalorder %s116, %s117
      %p129 = scmp.eq.s32.totalorder %s23, 1
      %p130 = por %p128, %p129
      %p132 = scmp.ne.s32.totalorder %s117, %s131
      %p133 = scmp.eq.s32.totalorder %s23, 0
      %p134 = por %p132, %p133
      %s135 = ssub.s32 %s17, %s24
      %p136 = scmp.eq.s32.totalorder %s135, 0
      %s138 = sadd.s32 %s137, 1
      %s139 = scalar_select %p136, %s137, %s138
      %p142 = pneg %p136
      %p143 = scmp.eq.s32.totalorder %s17, 1
      %p144 = por %p142, %p143
      %p145 = scmp.ne.s32.totalorder %s137, %s140
      %p146 = scmp.eq.s32.totalorder %s17, 0
      %p147 = por %p145, %p146
      %p148 = scmp.ne.s32.totalorder %s137, %s140
      %p149 = scmp.eq.s32.totalorder %s22, 1
      %p150 = por %p148, %p149
      %p151 = scmp.ne.s32.totalorder %s140, %s141
      %p152 = scmp.eq.s32.totalorder %s22, 0
      %p153 = por %p151, %p152
      %p154 = scmp.ne.s32.totalorder %s140, %s141
      %p155 = scmp.eq.s32.totalorder %s23, 1
      %p156 = por %p154, %p155
      %p158 = scmp.ne.s32.totalorder %s141, %s157
      %p159 = scmp.eq.s32.totalorder %s23, 0
      %p160 = por %p158, %p159
      %p161 = scmp.le.s32.totalorder 1, %s17
      %p162 = scmp.lt.s32.totalorder %s17, 3
      %p163 = pnand %p161, %p162
      %p164 = pneg %p163
      // Predicated region
      $region9: #{tpu_custom_call.1} parent=5 // pred_check
        _
      $region10: #{tpu_custom_call.1} parent=5 // pred_check_branch
        %166 = sbr.rel (%p163) target = $region12
      $region11: #{tpu_custom_call.1} parent=5 // pred_region
        %s167 = ssub.s32 %s17, 1
        // Predicated region
        $region13: #{tpu_custom_call.1} parent=11 // pred_check
          %p168 = pneg %p64
        $region14: #{tpu_custom_call.1} parent=11 // pred_check_branch
          %170 = sbr.rel (%p168) target = $region16
        $region15: #{tpu_custom_call.1} parent=11 // pred_region
          _
        $region16: #{tpu_custom_call.1} parent=11 // pred_fallthru
          _
        // Predicated region
        $region17: #{tpu_custom_call.1} parent=11 // pred_check
          %p171 = pneg %p85
        $region18: #{tpu_custom_call.1} parent=11 // pred_check_branch
          %173 = sbr.rel (%p171) target = $region20
        $region19: #{tpu_custom_call.1} parent=11 // pred_region
          _
        $region20: #{tpu_custom_call.1} parent=11 // pred_fallthru
          _
        // Predicated region
        $region21: #{tpu_custom_call.1} parent=11 // pred_check
          %p174 = pneg %p106
        $region22: #{tpu_custom_call.1} parent=11 // pred_check_branch
          %176 = sbr.rel (%p174) target = $region24
        $region23: #{tpu_custom_call.1} parent=11 // pred_region
          _
        $region24: #{tpu_custom_call.1} parent=11 // pred_fallthru
          _
        // Predicated region
        $region25: #{tpu_custom_call.1} parent=11 // pred_check
          %p177 = pneg %p127
        $region26: #{tpu_custom_call.1} parent=11 // pred_check_branch
          %179 = sbr.rel (%p177) target = $region28
        $region27: #{tpu_custom_call.1} parent=11 // pred_region
          _
        $region28: #{tpu_custom_call.1} parent=11 // pred_fallthru
          _
      $region12: #{tpu_custom_call.1} parent=5 // pred_fallthru
        _
      %p180 = scmp.lt.s32.totalorder %s17, 2
      // Predicated region
      $region29: #{tpu_custom_call.1} parent=5 // pred_check
        %p181 = pneg %p180
      $region30: #{tpu_custom_call.1} parent=5 // pred_check_branch
        %183 = sbr.rel (%p181) target = $region32
      $region31: #{tpu_custom_call.1} parent=5 // pred_region
        // Predicated region
        $region33: #{tpu_custom_call.1} parent=31 // pred_check
          %p184 = pneg %p37
        $region34: #{tpu_custom_call.1} parent=31 // pred_check_branch
          %186 = sbr.rel (%p184) target = $region36
        $region35: #{tpu_custom_call.1} parent=31 // pred_region
          %s187 = sand.u32 %s27, 1
          %s188 = scalar_lea.sflag [#allocation3], %s187
          %s189 = sand.u32 %s27, 1
          %s190 = smul.addr %s189, 32
          %s191 = scalar_lea.vmem [#allocation2], %s190
          %193 = vsyncadd %s188, 0
          %s194 = smul.addr %s17, 4
          %s195 = smul.addr %s194, 8
          %s196 = scalar_lea.hbm %s0, %s195
          %s197 = sshll.u32 %s196, 4
          %s198 = int_to_ptr.hbm [resolvable:$true] %s197
          %s199 = sshll.u32 %s191, 4
          %s200 = int_to_ptr.vmem [resolvable:$true] %s199
          %205 = dma.hbm_to_vmem [thread:$0]  %s198, 512, %s200, %s188, 256, 256, 16
        $region36: #{tpu_custom_call.1} parent=31 // pred_fallthru
          _
      $region32: #{tpu_custom_call.1} parent=5 // pred_fallthru
        _
      %p206 = scmp.le.s32.totalorder 1, %s17
      %p207 = scmp.lt.s32.totalorder %s17, 3
      %p208 = pnand %p206, %p207
      %p209 = pneg %p208
      // Predicated region
      $region37: #{tpu_custom_call.1} parent=5 // pred_check
        _
      $region38: #{tpu_custom_call.1} parent=5 // pred_check_branch
        %211 = sbr.rel (%p208) target = $region40
      $region39: #{tpu_custom_call.1} parent=5 // pred_region
        %s212 = ssub.s32 %s17, 1
        %s213 = sand.u32 %s30, 1
        %s214 = scalar_lea.sflag [#allocation3], %s213
        %s215 = sand.u32 %s30, 1
        %s216 = smul.addr %s215, 32
        %s217 = scalar_lea.vmem [#allocation2], %s216
        // Predicated region
        $region41: #{tpu_custom_call.1} parent=39 // pred_check
          %p218 = pneg %p43
        $region42: #{tpu_custom_call.1} parent=39 // pred_check_branch
          %220 = sbr.rel (%p218) target = $region44
        $region43: #{tpu_custom_call.1} parent=39 // pred_region
          %222 = dma.done %s214, 512
        $region44: #{tpu_custom_call.1} parent=39 // pred_fallthru
          _
        %s223 = sand.u32 %s30, 1
        %s224 = scalar_lea.sflag [#allocation3], %s223
        %s225 = sand.u32 %s30, 1
        %s226 = smul.addr %s225, 32
        %s227 = scalar_lea.vmem [#allocation2], %s226
        %p228 = pneg %p43
        %p229 = pneg %p40
        %p230 = pneg %p64
        %p231 = pneg %p61
        %p232 = pneg %p85
        %p233 = pneg %p82
        %p234 = pneg %p106
        %p235 = pneg %p103
        %p236 = pneg %p127
        %p237 = pneg %p124
        %p238 = pneg %p153
        %p239 = pneg %p150
        %s240 = sand.u32 %s140, 1
        %s241 = scalar_lea.sflag [#allocation4], %s240
        %s242 = sand.u32 %s140, 1
        %s243 = smul.addr %s242, 32
        %s244 = scalar_lea.vmem [#allocation5], %s243
        %v245 = vld [vmem:[%s217] sm:$0xff]
        %v246 = vld [vmem:[%s217 + $0x8] sm:$0xff]
        %v247 = vld [vmem:[%s217 + $0x10] sm:$0xff]
        %v248 = vld [vmem:[%s217 + $0x18] sm:$0xff]
        %v249 = vadd.f32 %v245, %v246
        %250 = vadd.xlane.f32.xlu0 %v249
        %v251 = vpop.xlane.xlu0 %250
        %v252 = vadd.f32 %v247, %v248
        %253 = vadd.xlane.f32.xlu0 %v252
        %v254 = vpop.xlane.xlu0 %253
        %v255 = vmul.f32 %v251, 0.00390625
        %v256 = vmul.f32 %v254, 0.00390625
        %v257 = vld [vmem:[%s1] sm:$0xff]
        %v258 = vld [vmem:[%s1 + $0x8] sm:$0xff]
        %v259 = vld [vmem:[%s2] sm:$0x1]
        %v262 = vlaneseq
        %v263 = vand.u32 %v262, 127
        %v264 = vperm.slane %v255, %v263
        %v265 = vadd.s32 %v263, 4294967288
        %v266 = vperm.slane %v256, %v265
        %vm267 = vcmask 130112
        %v268 = vsel %vm267, %v266, %v264
        %vm269 = vcmask 130048
        %v270 = vsel %vm269, %v268, 0
        %272 = vmatpush.msra.mxu0 0.0
        %273 = vmatpush.msra.mxu0 0.0
        %274 = vmatpush.msra.mxu0 0.0
        %275 = vmatpush.msra.mxu0 0.0
        %276 = vmatpush.msra.mxu0 0.0
        %277 = vmatpush.msra.mxu0 0.0
        %278 = vmatpush.msra.mxu0 0.0
        %279 = vmatpush.msra.mxu0 0.0
        %280 = vmatpush.msra.mxu0 0.0
        %281 = vmatpush.msra.mxu0 0.0
        %282 = vmatpush.msra.mxu0 0.0
        %283 = vmatpush.msra.mxu0 0.0
        %284 = vmatpush.msra.mxu0 0.0
        %285 = vmatpush.msra.mxu0 0.0
        %286 = vmatpush.msra.mxu0 %v258
        %287 = vmatpush.msra.mxu0 %v257
        %288 = vmatmul.f32.gmra.mxu0 %v270
        %v289 = vpop.f32.mrf.mxu0
        %v290 = vadd.f32 %v259, %v289
        %291 = vdwg.mxu0
        %v292 = vmax.f32 %v290, 0.0
        %v293 = vld [vmem:[%s3] sm:$0x3]
        %v294 = vld [vmem:[%s4] sm:$0x1]
        %vm295 = vcmask 15360
        %v297 = vsel %vm295, %v292, 0
        %vm299 = vcmask 1041408
        %v301 = vsel %vm299, %v293, 0
        %303 = vmatpush.msra.mxu0 0.0
        %304 = vmatpush.msra.mxu0 0.0
        %305 = vmatpush.msra.mxu0 0.0
        %306 = vmatpush.msra.mxu0 0.0
        %307 = vmatpush.msra.mxu0 0.0
        %308 = vmatpush.msra.mxu0 0.0
        %309 = vmatpush.msra.mxu0 0.0
        %310 = vmatpush.msra.mxu0 0.0
        %311 = vmatpush.msra.mxu0 0.0
        %312 = vmatpush.msra.mxu0 0.0
        %313 = vmatpush.msra.mxu0 0.0
        %314 = vmatpush.msra.mxu0 0.0
        %315 = vmatpush.msra.mxu0 0.0
        %316 = vmatpush.msra.mxu0 0.0
        %317 = vmatpush.msra.mxu0 0.0
        %318 = vmatpush.msra.mxu0 %v301
        %319 = vmatmul.f32.gmra.mxu0 %v297
        %v320 = vpop.f32.mrf.mxu0
        %v321 = vadd.f32 %v294, %v320
        %322 = vdwg.mxu0
        %v323 = vxor.u32 %v321, 2147483648
        %v324 = vmul.f32 %v323, 1.442695
        %v325 = vpow.pop %v324
        %v326 = vadd.f32 %v325, 1.0
        %v327 = vrcp.pop %v326
        %v328 = vmul.f32 %v326, %v327
        %v329 = vsub.f32 1.0, %v328
        %v330 = vmul.f32 %v327, %v329
        %v331 = vadd.f32 %v327, %v330
        %vm332 = vweird.f32 %v326
        %vm333 = vweird.f32 %v327
        %vm334 = vmor %vm332, %vm333
        %v335 = vsel %vm334, %v327, %v331
        %v336 = vand.u32 2147483647, %v326
        %vm337 = vcmp.eq.f32.partialorder %v336, 8.507059e+37
        %v338 = vand.u32 %v326, 2147483648
        %v339 = vor.u32 1.1754944e-38, %v338
        %v340 = vsel %vm337, %v339, %v335
        %v341 = vmul.f32 1.0, %v340
        %v342 = vperm.slane %v341, 0
        %v343 = vlaneseq
        %v344 = vshrl.u32 %v343, 7
        %346 = vset.pattern.permute.xlu0 %v344
        %347 = vperm.xlu0 %346, %v342
        %v348 = vpop.permute.xlu0 %347
        %v349 = vlaneseq
        %v350 = vshrl.u32 %v349, 7
        %v351 = vadd.s32 %v350, 8
        %352 = vset.pattern.permute.xlu0 %v351
        %353 = vperm.xlu0 %352, %v342
        %v354 = vpop.permute.xlu0 %353
        %v355 = vmul.f32 %v245, %v348
        %v356 = vmul.f32 %v246, %v348
        %v357 = vmul.f32 %v247, %v354
        %v358 = vmul.f32 %v248, %v354
        %359 = vst [vmem:[%s244] sm:$0xff] %v355
        %360 = vst [vmem:[%s244 + $0x8] sm:$0xff] %v356
        %361 = vst [vmem:[%s244 + $0x10] sm:$0xff] %v357
        %362 = vst [vmem:[%s244 + $0x18] sm:$0xff] %v358
        %s363 = sand.u32 %s140, 1
        %s364 = scalar_lea.sflag [#allocation4], %s363
        %s365 = sand.u32 %s140, 1
        %s366 = smul.addr %s365, 32
        %s367 = scalar_lea.vmem [#allocation5], %s366
        // Predicated region
        $region45: #{tpu_custom_call.1} parent=39 // pred_check
          %p368 = pneg %p150
        $region46: #{tpu_custom_call.1} parent=39 // pred_check_branch
          %370 = sbr.rel (%p368) target = $region48
        $region47: #{tpu_custom_call.1} parent=39 // pred_region
          %372 = vsyncadd %s364, 0
          %s373 = smul.addr %s22, 4
          %s374 = smul.addr %s373, 8
          %s375 = scalar_lea.hbm %s5, %s374
          %s376 = sshll.u32 %s367, 4
          %s377 = int_to_ptr.vmem [resolvable:$true] %s376
          %s378 = sshll.u32 %s375, 4
          %s379 = int_to_ptr.hbm [resolvable:$true] %s378
          %384 = dma.vmem_to_hbm [thread:$0]  %s377, 512, %s379, %s364, 256, 256, 16
        $region48: #{tpu_custom_call.1} parent=39 // pred_fallthru
          _
      $region40: #{tpu_custom_call.1} parent=5 // pred_fallthru
        _
      %p385 = scmp.le.s32.totalorder 2, %s17
      // Predicated region
      $region49: #{tpu_custom_call.1} parent=5 // pred_check
        %p386 = pneg %p385
      $region50: #{tpu_custom_call.1} parent=5 // pred_check_branch
        %388 = sbr.rel (%p386) target = $region52
      $region51: #{tpu_custom_call.1} parent=5 // pred_region
        %s389 = ssub.s32 %s17, 2
        // Predicated region
        $region53: #{tpu_custom_call.1} parent=51 // pred_check
          %p390 = pneg %p156
        $region54: #{tpu_custom_call.1} parent=51 // pred_check_branch
          %392 = sbr.rel (%p390) target = $region56
        $region55: #{tpu_custom_call.1} parent=51 // pred_region
          %s393 = sand.u32 %s141, 1
          %s394 = scalar_lea.sflag [#allocation4], %s393
          %s395 = sand.u32 %s141, 1
          %s396 = smul.addr %s395, 32
          %s397 = scalar_lea.vmem [#allocation5], %s396
          %399 = dma.done %s394, 512
        $region56: #{tpu_custom_call.1} parent=51 // pred_fallthru
          _
      $region52: #{tpu_custom_call.1} parent=5 // pred_fallthru
        _
    $region6: #{tpu_custom_call.1} parent=1 // loop_footer
      %s21 = sadd.s32 1, %s17
    $region7: #{tpu_custom_call.1} parent=1 // loop_footer_branch
      %16 = sbr.rel target = $region3
    $region8: #{tpu_custom_call.1} parent=1 // loop_exit
      _
    %400 = vsyncpa [#allocation3], 1
    %s401 = scalar_lea.sflag [#allocation3], 1
    %402 = vsyncpa %s401, 1
    %403 = vsyncpa [#allocation4], 1
    %s404 = scalar_lea.sflag [#allocation4], 1
    %405 = vsyncpa %s404, 1

</llo_original>
